<compile_context>
chip_gen: v7x
topology: tpu7x:2x2x1
jax: 0.10.0
libtpu: 0.0.40
codegen_flags: <defaults>
</compile_context>

<pallas_src>
import functools

import jax
import jax.numpy as jnp
from jax.experimental import pallas as pl
from jax.experimental.pallas import tpu as pltpu


def _round_up(x, m):
    return (x + m - 1) // m * m


def _bert_output_kernel(x_ref, w_ref, b_ref, res_ref, g_ref, beta_ref, o_ref, *, eps):
    # x:   [TM, K]   (K = intermediate size = 4H)
    # w:   [K, H]    (pre-transposed in the wrapper; canonical MXU RHS layout)
    # b, g, beta: [1, H] (f32, VMEM-resident)
    # res: [TM, H]   (residual / input_tensor rows)
    y = jnp.dot(x_ref[...], w_ref[...], preferred_element_type=jnp.float32)
    y = y + b_ref[...]

    # TODO(synk): training-mode dropout would need pltpu.prng_seed/prng_random_bits;
    # the inference forward is the identity, so it is omitted here.

    # Residual add + LayerNorm over the hidden axis, all in f32.
    y = y + res_ref[...].astype(jnp.float32)
    mean = jnp.mean(y, axis=-1, keepdims=True)
    centered = y - mean
    var = jnp.mean(centered * centered, axis=-1, keepdims=True)
    out = centered * jax.lax.rsqrt(var + eps)
    out = out * g_ref[...] + beta_ref[...]
    o_ref[...] = out.astype(o_ref.dtype)


def bert_output(hidden_states, input_tensor, params, params_prefix="output",
                layer_norm_eps=1e-12):
    """hidden_states: [..., 4H]; input_tensor: [..., H].

    params: dict with
      f"{prefix}_dense_weight"     [H, 4H]
      f"{prefix}_dense_bias"       [H]
      f"{prefix}_LayerNorm_weight" [H]
      f"{prefix}_LayerNorm_bias"   [H]
    """
    w = params[f"{params_prefix}_dense_weight"]          # [H, K]
    b = params[f"{params_prefix}_dense_bias"]            # [H]
    gamma = params[f"{params_prefix}_LayerNorm_weight"]  # [H]
    beta = params[f"{params_prefix}_LayerNorm_bias"]     # [H]

    H, K = w.shape
    out_shape_logical = input_tensor.shape               # [..., H]

    # Flatten all leading dims into a single row/token axis. No jnp.pad: the
    # ragged tail block is handled by Pallas masking (rows are independent
    # under the matmul and the row-wise LayerNorm).
    x = hidden_states.reshape(-1, K)
    res = input_tensor.reshape(-1, H)
    M = x.shape[0]
    dtype = x.dtype
    itemsize = int(jnp.dtype(dtype).itemsize)

    # One-time wrapper transpose + dtype match (avoids in-kernel relayout and
    # implicit promotion inside the dot).
    w_t = jnp.transpose(w).astype(dtype)                 # [K, H]

    # Small per-channel params resident in VMEM as f32 rows.
    b2 = b.reshape(1, H).astype(jnp.float32)
    g2 = gamma.reshape(1, H).astype(jnp.float32)
    beta2 = beta.reshape(1, H).astype(jnp.float32)

    # Sublane packing per dtype: 8 rows (f32), 16 (bf16), 32 (int8/fp8).
    sub = max(8, 32 // max(itemsize, 1))
    tm_max = 512 if itemsize <= 2 else 256
    tm = min(tm_max, _round_up(M, sub))

    # Give the second v7x TensorCore work for short sequences (grid >= 2).
    if pl.cdiv(M, tm) < 2 and M > sub:
        tm = max(sub, _round_up(-(-M // 2), sub))

    # VMEM accounting: double-buffered x/res/out tiles + resident W/params.
    def _vmem_need(tm_, w_buffers):
        tiles = 2 * tm_ * (K + 2 * H) * itemsize
        resident = w_buffers * K * H * itemsize + 3 * H * 4
        return tiles + resident + (4 << 20)              # ~4 MiB headroom

    budget = 48 << 20                                    # conservative vs v7x 64 MiB
    while _vmem_need(tm, 1) > budget and tm > sub:
        tm = max(sub, _round_up(tm // 2, sub))

    grid = (pl.cdiv(M, tm),)
    kernel = functools.partial(_bert_output_kernel, eps=float(layer_norm_eps))

    cost = pl.CostEstimate(
        flops=2 * M * K * H,
        transcendentals=M,                               # one rsqrt per row
        bytes_accessed=(M * K + 2 * M * H + K * H) * itemsize + 3 * H * 4,
    )

    def _run(single_buffer_params):
        pm = pl.Buffered(1) if single_buffer_params else None
        w_buffers = 1 if single_buffer_params else 2
        vmem_limit = int(max(32 << 20, min(_vmem_need(tm, w_buffers), 64 << 20)))
        return pl.pallas_call(
            kernel,
            out_shape=jax.ShapeDtypeStruct((M, H), dtype),
            grid=grid,
            in_specs=[
                pl.BlockSpec((tm, K), lambda i: (i, 0)),                   # x rows: tiled
                pl.BlockSpec((K, H), lambda i: (0, 0), pipeline_mode=pm),  # W: resident
                pl.BlockSpec((1, H), lambda i: (0, 0), pipeline_mode=pm),  # bias
                pl.BlockSpec((tm, H), lambda i: (i, 0)),                   # residual rows
                pl.BlockSpec((1, H), lambda i: (0, 0), pipeline_mode=pm),  # LN gamma
                pl.BlockSpec((1, H), lambda i: (0, 0), pipeline_mode=pm),  # LN beta
            ],
            out_specs=pl.BlockSpec((tm, H), lambda i: (i, 0)),
            compiler_params=pltpu.CompilerParams(
                dimension_semantics=("parallel",),       # shard rows across TCs on v7x
                vmem_limit_bytes=vmem_limit,
            ),
            cost_estimate=cost,
        )(x, w_t, b2, res, g2, beta2)

    try:
        out = _run(True)
    except Exception:
        # Fallback if this JAX build rejects single-buffered (Buffered(1)) specs.
        out = _run(False)

    return out.reshape(out_shape_logical)


if __name__ == "__main__":
    key = jax.random.PRNGKey(0)
    k_hs, k_in, k_w, k_b, k_g, k_be = jax.random.split(key, 6)

    B, S, H = 2, 8, 32
    K = 4 * H  # intermediate size
    eps = 1e-12

    hidden_states = jax.random.normal(k_hs, (B, S, K), dtype=jnp.float32)
    input_tensor = jax.random.normal(k_in, (B, S, H), dtype=jnp.float32)
    params = {
        "output_dense_weight": jax.random.normal(k_w, (H, K), dtype=jnp.float32) * 0.02,
        "output_dense_bias": jax.random.normal(k_b, (H,), dtype=jnp.float32) * 0.02,
        "output_LayerNorm_weight": 1.0 + 0.02 * jax.random.normal(k_g, (H,), dtype=jnp.float32),
        "output_LayerNorm_bias": 0.02 * jax.random.normal(k_be, (H,), dtype=jnp.float32),
    }

    out = bert_output(hidden_states, input_tensor, params,
                      params_prefix="output", layer_norm_eps=eps)
    out = jax.block_until_ready(out)

    # Reference in plain JAX (dropout is identity at inference).
    lin = hidden_states @ params["output_dense_weight"].T + params["output_dense_bias"]
    y = lin + input_tensor
    mean = y.mean(axis=-1, keepdims=True)
    var = ((y - mean) ** 2).mean(axis=-1, keepdims=True)
    ref = (y - mean) / jnp.sqrt(var + eps)
    ref = ref * params["output_LayerNorm_weight"] + params["output_LayerNorm_bias"]

    assert out.shape == (B, S, H)
    assert jnp.allclose(out, ref, atol=1e-5, rtol=1e-5), float(jnp.max(jnp.abs(out - ref)))

    print("KERNEL_OK")
</pallas_src>

<mosaic_0001>
module attributes {stable_mosaic.version = 11 : i64} {
  func.func @_bert_output_kernel(%arg0: i32, %arg1: memref<8x128xf32, #tpu.memory_space<vmem>>, %arg2: memref<128x32xf32, #tpu.memory_space<vmem>>, %arg3: memref<1x32xf32, #tpu.memory_space<vmem>>, %arg4: memref<8x32xf32, #tpu.memory_space<vmem>>, %arg5: memref<1x32xf32, #tpu.memory_space<vmem>>, %arg6: memref<1x32xf32, #tpu.memory_space<vmem>>, %arg7: memref<8x32xf32, #tpu.memory_space<vmem>>) attributes {dimension_semantics = [#tpu.dimension_semantics<parallel>], iteration_bounds = array<i64: 2>, scalar_prefetch = 0 : i64, scratch_operands = 0 : i64, tpu.core_type = #tpu.core_type<tc>, window_params = [{transform_indices = @transform_0, window_bounds = array<i64: 8, 128>}, {pipeline_mode = #tpu.pipeline_mode<synchronous>, transform_indices = @transform_1, window_bounds = array<i64: 128, 32>}, {pipeline_mode = #tpu.pipeline_mode<synchronous>, transform_indices = @transform_2, window_bounds = array<i64: 1, 32>}, {transform_indices = @transform_3, window_bounds = array<i64: 8, 32>}, {pipeline_mode = #tpu.pipeline_mode<synchronous>, transform_indices = @transform_4, window_bounds = array<i64: 1, 32>}, {pipeline_mode = #tpu.pipeline_mode<synchronous>, transform_indices = @transform_5, window_bounds = array<i64: 1, 32>}, {transform_indices = @transform_6, window_bounds = array<i64: 8, 32>}]} {
    %c0 = arith.constant 0 : index
    %c0_0 = arith.constant 0 : index
    %0 = vector.load %arg1[%c0, %c0_0] : memref<8x128xf32, #tpu.memory_space<vmem>>, vector<8x128xf32>
    %c0_1 = arith.constant 0 : index
    %c0_2 = arith.constant 0 : index
    %1 = vector.load %arg2[%c0_1, %c0_2] : memref<128x32xf32, #tpu.memory_space<vmem>>, vector<128x32xf32>
    %cst = arith.constant dense<0.000000e+00> : vector<8x32xf32>
    %2 = tpu.matmul %0, %1, %cst {dimension_numbers = #tpu.dot_dimension_numbers<[1], [0], [0], [1], [0, 0, 1, 1], [], []>} : vector<8x128xf32>, vector<128x32xf32>, vector<8x32xf32> -> vector<8x32xf32>
    %c0_3 = arith.constant 0 : index
    %c0_4 = arith.constant 0 : index
    %3 = vector.load %arg3[%c0_3, %c0_4] : memref<1x32xf32, #tpu.memory_space<vmem>>, vector<1x32xf32>
    %4 = vector.broadcast %3 : vector<1x32xf32> to vector<8x32xf32>
    %5 = arith.addf %2, %4 : vector<8x32xf32>
    %c0_5 = arith.constant 0 : index
    %c0_6 = arith.constant 0 : index
    %6 = vector.load %arg4[%c0_5, %c0_6] : memref<8x32xf32, #tpu.memory_space<vmem>>, vector<8x32xf32>
    %7 = arith.addf %5, %6 : vector<8x32xf32>
    %cst_7 = arith.constant dense<0.000000e+00> : vector<8xf32>
    %8 = vector.multi_reduction <add>, %7, %cst_7 [1] : vector<8x32xf32> to vector<8xf32>
    %9 = vector.shape_cast %8 : vector<8xf32> to vector<8x1xf32>
    %cst_8 = arith.constant 3.200000e+01 : f32
    %10 = vector.broadcast %cst_8 : f32 to vector<8x1xf32>
    %11 = arith.divf %9, %10 : vector<8x1xf32>
    %12 = vector.broadcast %11 : vector<8x1xf32> to vector<8x32xf32>
    %13 = arith.subf %7, %12 : vector<8x32xf32>
    %14 = arith.mulf %13, %13 : vector<8x32xf32>
    %cst_9 = arith.constant dense<0.000000e+00> : vector<8xf32>
    %15 = vector.multi_reduction <add>, %14, %cst_9 [1] : vector<8x32xf32> to vector<8xf32>
    %16 = vector.shape_cast %15 : vector<8xf32> to vector<8x1xf32>
    %cst_10 = arith.constant 3.200000e+01 : f32
    %17 = vector.broadcast %cst_10 : f32 to vector<8x1xf32>
    %18 = arith.divf %16, %17 : vector<8x1xf32>
    %cst_11 = arith.constant 9.99999996E-13 : f32
    %19 = vector.broadcast %cst_11 : f32 to vector<8x1xf32>
    %20 = arith.addf %18, %19 : vector<8x1xf32>
    %21 = math.rsqrt %20 : vector<8x1xf32>
    %22 = vector.broadcast %21 : vector<8x1xf32> to vector<8x32xf32>
    %23 = arith.mulf %13, %22 : vector<8x32xf32>
    %c0_12 = arith.constant 0 : index
    %c0_13 = arith.constant 0 : index
    %24 = vector.load %arg5[%c0_12, %c0_13] : memref<1x32xf32, #tpu.memory_space<vmem>>, vector<1x32xf32>
    %25 = vector.broadcast %24 : vector<1x32xf32> to vector<8x32xf32>
    %26 = arith.mulf %23, %25 : vector<8x32xf32>
    %c0_14 = arith.constant 0 : index
    %c0_15 = arith.constant 0 : index
    %27 = vector.load %arg6[%c0_14, %c0_15] : memref<1x32xf32, #tpu.memory_space<vmem>>, vector<1x32xf32>
    %28 = vector.broadcast %27 : vector<1x32xf32> to vector<8x32xf32>
    %29 = arith.addf %26, %28 : vector<8x32xf32>
    %c0_16 = arith.constant 0 : index
    %c0_17 = arith.constant 0 : index
    %30 = vector.load %arg7[%c0_16, %c0_17] : memref<8x32xf32, #tpu.memory_space<vmem>>, vector<8x32xf32>
    tpu.vector_store %arg7[%c0_16, %c0_17], %29 {strides = array<i32>} : memref<8x32xf32, #tpu.memory_space<vmem>>, vector<8x32xf32>,
    return
  }
  func.func @transform_0(%arg0: i32) -> (i32, i32) {
    %c0_i32 = arith.constant 0 : i32
    %c0_i32_0 = arith.constant 0 : i32
    return %arg0, %c0_i32 : i32, i32
  }
  func.func @transform_1(%arg0: i32) -> (i32, i32) {
    %c0_i32 = arith.constant 0 : i32
    %c0_i32_0 = arith.constant 0 : i32
    %c0_i32_1 = arith.constant 0 : i32
    return %c0_i32, %c0_i32_0 : i32, i32
  }
  func.func @transform_2(%arg0: i32) -> (i32, i32) {
    %c0_i32 = arith.constant 0 : i32
    %c0_i32_0 = arith.constant 0 : i32
    %c0_i32_1 = arith.constant 0 : i32
    return %c0_i32, %c0_i32_0 : i32, i32
  }
  func.func @transform_3(%arg0: i32) -> (i32, i32) {
    %c0_i32 = arith.constant 0 : i32
    %c0_i32_0 = arith.constant 0 : i32
    return %arg0, %c0_i32 : i32, i32
  }
  func.func @transform_4(%arg0: i32) -> (i32, i32) {
    %c0_i32 = arith.constant 0 : i32
    %c0_i32_0 = arith.constant 0 : i32
    %c0_i32_1 = arith.constant 0 : i32
    return %c0_i32, %c0_i32_0 : i32, i32
  }
  func.func @transform_5(%arg0: i32) -> (i32, i32) {
    %c0_i32 = arith.constant 0 : i32
    %c0_i32_0 = arith.constant 0 : i32
    %c0_i32_1 = arith.constant 0 : i32
    return %c0_i32, %c0_i32_0 : i32, i32
  }
  func.func @transform_6(%arg0: i32) -> (i32, i32) {
    %c0_i32 = arith.constant 0 : i32
    %c0_i32_0 = arith.constant 0 : i32
    return %arg0, %c0_i32 : i32, i32
  }
}

module attributes {stable_mosaic.version = 11 : i64} {
  func.func @_bert_output_kernel(%arg0: i32, %arg1: memref<8x128xf32, #tpu.memory_space<vmem>>, %arg2: memref<128x32xf32, #tpu.memory_space<vmem>>, %arg3: memref<1x32xf32, #tpu.memory_space<vmem>>, %arg4: memref<8x32xf32, #tpu.memory_space<vmem>>, %arg5: memref<1x32xf32, #tpu.memory_space<vmem>>, %arg6: memref<1x32xf32, #tpu.memory_space<vmem>>, %arg7: memref<8x32xf32, #tpu.memory_space<vmem>>) attributes {dimension_semantics = [#tpu.dimension_semantics<parallel>], iteration_bounds = array<i64: 2>, scalar_prefetch = 0 : i64, scratch_operands = 0 : i64, tpu.core_type = #tpu.core_type<tc>, window_params = [{transform_indices = @transform_0, window_bounds = array<i64: 8, 128>}, {pipeline_mode = #tpu.pipeline_mode<synchronous>, transform_indices = @transform_1, window_bounds = array<i64: 128, 32>}, {pipeline_mode = #tpu.pipeline_mode<synchronous>, transform_indices = @transform_2, window_bounds = array<i64: 1, 32>}, {transform_indices = @transform_3, window_bounds = array<i64: 8, 32>}, {pipeline_mode = #tpu.pipeline_mode<synchronous>, transform_indices = @transform_4, window_bounds = array<i64: 1, 32>}, {pipeline_mode = #tpu.pipeline_mode<synchronous>, transform_indices = @transform_5, window_bounds = array<i64: 1, 32>}, {transform_indices = @transform_6, window_bounds = array<i64: 8, 32>}]} {
    %c0 = arith.constant 0 : index
    %c0_0 = arith.constant 0 : index
    %0 = vector.load %arg1[%c0, %c0_0] : memref<8x128xf32, #tpu.memory_space<vmem>>, vector<8x128xf32>
    %c0_1 = arith.constant 0 : index
    %c0_2 = arith.constant 0 : index
    %1 = vector.load %arg2[%c0_1, %c0_2] : memref<128x32xf32, #tpu.memory_space<vmem>>, vector<128x32xf32>
    %cst = arith.constant dense<0.000000e+00> : vector<8x32xf32>
    %2 = tpu.matmul %0, %1, %cst {dimension_numbers = #tpu.dot_dimension_numbers<[1], [0], [0], [1], [0, 0, 1, 1], [], []>} : vector<8x128xf32>, vector<128x32xf32>, vector<8x32xf32> -> vector<8x32xf32>
    %c0_3 = arith.constant 0 : index
    %c0_4 = arith.constant 0 : index
    %3 = vector.load %arg3[%c0_3, %c0_4] : memref<1x32xf32, #tpu.memory_space<vmem>>, vector<1x32xf32>
    %4 = vector.broadcast %3 : vector<1x32xf32> to vector<8x32xf32>
    %5 = arith.addf %2, %4 : vector<8x32xf32>
    %c0_5 = arith.constant 0 : index
    %c0_6 = arith.constant 0 : index
    %6 = vector.load %arg4[%c0_5, %c0_6] : memref<8x32xf32, #tpu.memory_space<vmem>>, vector<8x32xf32>
    %7 = arith.addf %5, %6 : vector<8x32xf32>
    %cst_7 = arith.constant dense<0.000000e+00> : vector<8xf32>
    %8 = vector.multi_reduction <add>, %7, %cst_7 [1] : vector<8x32xf32> to vector<8xf32>
    %9 = vector.shape_cast %8 : vector<8xf32> to vector<8x1xf32>
    %cst_8 = arith.constant 3.200000e+01 : f32
    %10 = vector.broadcast %cst_8 : f32 to vector<8x1xf32>
    %11 = arith.divf %9, %10 : vector<8x1xf32>
    %12 = vector.broadcast %11 : vector<8x1xf32> to vector<8x32xf32>
    %13 = arith.subf %7, %12 : vector<8x32xf32>
    %14 = arith.mulf %13, %13 : vector<8x32xf32>
    %cst_9 = arith.constant dense<0.000000e+00> : vector<8xf32>
    %15 = vector.multi_reduction <add>, %14, %cst_9 [1] : vector<8x32xf32> to vector<8xf32>
    %16 = vector.shape_cast %15 : vector<8xf32> to vector<8x1xf32>
    %cst_10 = arith.constant 3.200000e+01 : f32
    %17 = vector.broadcast %cst_10 : f32 to vector<8x1xf32>
    %18 = arith.divf %16, %17 : vector<8x1xf32>
    %cst_11 = arith.constant 9.99999996E-13 : f32
    %19 = vector.broadcast %cst_11 : f32 to vector<8x1xf32>
    %20 = arith.addf %18, %19 : vector<8x1xf32>
    %21 = math.rsqrt %20 : vector<8x1xf32>
    %22 = vector.broadcast %21 : vector<8x1xf32> to vector<8x32xf32>
    %23 = arith.mulf %13, %22 : vector<8x32xf32>
    %c0_12 = arith.constant 0 : index
    %c0_13 = arith.constant 0 : index
    %24 = vector.load %arg5[%c0_12, %c0_13] : memref<1x32xf32, #tpu.memory_space<vmem>>, vector<1x32xf32>
    %25 = vector.broadcast %24 : vector<1x32xf32> to vector<8x32xf32>
    %26 = arith.mulf %23, %25 : vector<8x32xf32>
    %c0_14 = arith.constant 0 : index
    %c0_15 = arith.constant 0 : index
    %27 = vector.load %arg6[%c0_14, %c0_15] : memref<1x32xf32, #tpu.memory_space<vmem>>, vector<1x32xf32>
    %28 = vector.broadcast %27 : vector<1x32xf32> to vector<8x32xf32>
    %29 = arith.addf %26, %28 : vector<8x32xf32>
    %c0_16 = arith.constant 0 : index
    %c0_17 = arith.constant 0 : index
    %30 = vector.load %arg7[%c0_16, %c0_17] : memref<8x32xf32, #tpu.memory_space<vmem>>, vector<8x32xf32>
    tpu.vector_store %arg7[%c0_16, %c0_17], %29 {strides = array<i32>} : memref<8x32xf32, #tpu.memory_space<vmem>>, vector<8x32xf32>,
    return
  }
  func.func @transform_0(%arg0: i32) -> (i32, i32) {
    %c0_i32 = arith.constant 0 : i32
    %c0_i32_0 = arith.constant 0 : i32
    return %arg0, %c0_i32 : i32, i32
  }
  func.func @transform_1(%arg0: i32) -> (i32, i32) {
    %c0_i32 = arith.constant 0 : i32
    %c0_i32_0 = arith.constant 0 : i32
    %c0_i32_1 = arith.constant 0 : i32
    return %c0_i32, %c0_i32_0 : i32, i32
  }
  func.func @transform_2(%arg0: i32) -> (i32, i32) {
    %c0_i32 = arith.constant 0 : i32
    %c0_i32_0 = arith.constant 0 : i32
    %c0_i32_1 = arith.constant 0 : i32
    return %c0_i32, %c0_i32_0 : i32, i32
  }
  func.func @transform_3(%arg0: i32) -> (i32, i32) {
    %c0_i32 = arith.constant 0 : i32
    %c0_i32_0 = arith.constant 0 : i32
    return %arg0, %c0_i32 : i32, i32
  }
  func.func @transform_4(%arg0: i32) -> (i32, i32) {
    %c0_i32 = arith.constant 0 : i32
    %c0_i32_0 = arith.constant 0 : i32
    %c0_i32_1 = arith.constant 0 : i32
    return %c0_i32, %c0_i32_0 : i32, i32
  }
  func.func @transform_5(%arg0: i32) -> (i32, i32) {
    %c0_i32 = arith.constant 0 : i32
    %c0_i32_0 = arith.constant 0 : i32
    %c0_i32_1 = arith.constant 0 : i32
    return %c0_i32, %c0_i32_0 : i32, i32
  }
  func.func @transform_6(%arg0: i32) -> (i32, i32) {
    %c0_i32 = arith.constant 0 : i32
    %c0_i32_0 = arith.constant 0 : i32
    return %arg0, %c0_i32 : i32, i32
  }
}

</mosaic_0001>

<llo_original>
// kernel: tpu_custom_call.1
$region0: #{tpu_custom_call.1}
  #allocation0 [shape = 'u32[]', space=smem, size = 0x4, offset = 0x4, fixed_abs, tag = 'smem constant byte address 0x4 - core index']
  #allocation1 [shape = 'u32[144,128]{1,0:T(1,128)}', space=vmem, size = 0x12000, scoped, tag = 'internal scratch']
  %s0 = inlined_call_operand.vmem [shape: f32[16,128], index: 0, kind: input, shape index: {}]
  %s1 = inlined_call_operand.vmem [shape: f32[128,32], index: 1, kind: input, shape index: {}]
  %s2 = inlined_call_operand.vmem [shape: f32[1,32], index: 2, kind: input, shape index: {}]
  %s3 = inlined_call_operand.vmem [shape: f32[16,32], index: 3, kind: input, shape index: {}]
  %s4 = inlined_call_operand.vmem [shape: f32[1,32], index: 4, kind: input, shape index: {}]
  %s5 = inlined_call_operand.vmem [shape: f32[1,32], index: 5, kind: input, shape index: {}]
  %s6 = inlined_call_operand.hbm [shape: f32[16,32], index: 6, kind: output, shape index: {}]
  %s7 = sld [smem:[#allocation0]]
  $region57: #{tpu_custom_call.1} parent=0
    _
  %s9 = ssub.s32 1, %s7
  %s10 = scalar_select 0, %s9, %s7
  $region1: #{tpu_custom_call.1} parent=0
    #allocation2 [shape = 'u8[8192]{0}', space=vmem, size = 0x2000, scoped, tag = 'output window, operand 0']
    #allocation3 [shape = 's32[2]{0}', space=sflag, size = 0x8, scoped, tag = 'scoped memory for tpu_custom_call.1']
    %11 = vsyncpa [#allocation3], 0
    %s12 = scalar_lea.sflag [#allocation3], 1
    %13 = vsyncpa %s12, 0
    loop: start=0, step=1, limit=4
    $region2: #{tpu_custom_call.1} parent=1 // loop_pre_header
      _
    $region3: #{tpu_custom_call.1} parent=1 // loop_header
      %s15 = sphi 0, %s19
      %p16 = scmp.ge.s32.totalorder %s15, 4
      %s25 = sphi 0, %s27
      %s28 = sphi 0, %s25
      %s29 = sphi 0, %s28
      %s45 = sphi 0, %s29
      %s49 = sphi 0, %s49
      %s51 = sphi 0, %s49
      %s52 = sphi 0, %s51
      %s66 = sphi 0, %s52
      %s70 = sphi 0, %s70
      %s72 = sphi 0, %s70
      %s73 = sphi 0, %s72
      %s87 = sphi 0, %s73
      %s93 = sphi 0, %s95
      %s96 = sphi 0, %s93
      %s97 = sphi 0, %s96
      %s113 = sphi 0, %s97
      %s117 = sphi 0, %s117
      %s119 = sphi 0, %s117
      %s120 = sphi 0, %s119
      %s134 = sphi 0, %s120
      %s138 = sphi 0, %s138
      %s140 = sphi 0, %s138
      %s141 = sphi 0, %s140
      %s155 = sphi 0, %s141
      %s161 = sphi 0, %s163
      %s164 = sphi 0, %s161
      %s165 = sphi 0, %s164
      %s181 = sphi 0, %s165
    $region4: #{tpu_custom_call.1} parent=1 // loop_header_branch
      %18 = sbr.rel (%p16) target = $region8
    $region5: #{tpu_custom_call.1} parent=1 // loop_body
      %s20 = ssub.s32 %s15, 1
      %s21 = ssub.s32 %s15, 2
      %s22 = sadd.s32 %s15, 1
      %s23 = ssub.s32 %s15, %s22
      %p24 = scmp.eq.s32.totalorder %s23, 0
      %s26 = sadd.s32 %s25, 1
      %s27 = scalar_select %p24, %s25, %s26
      %p30 = pneg %p24
      %p31 = scmp.eq.s32.totalorder %s15, 1
      %p32 = por %p30, %p31
      %p33 = scmp.ne.s32.totalorder %s25, %s28
      %p34 = scmp.eq.s32.totalorder %s15, 0
      %p35 = por %p33, %p34
      %p36 = scmp.ne.s32.totalorder %s25, %s28
      %p37 = scmp.eq.s32.totalorder %s20, 1
      %p38 = por %p36, %p37
      %p39 = scmp.ne.s32.totalorder %s28, %s29
      %p40 = scmp.eq.s32.totalorder %s20, 0
      %p41 = por %p39, %p40
      %p42 = scmp.ne.s32.totalorder %s28, %s29
      %p43 = scmp.eq.s32.totalorder %s21, 1
      %p44 = por %p42, %p43
      %p46 = scmp.ne.s32.totalorder %s29, %s45
      %p47 = scmp.eq.s32.totalorder %s21, 0
      %p48 = por %p46, %p47
      %s50 = sadd.s32 %s49, 1
      %p53 = scmp.eq.s32.totalorder %s15, 1
      %p54 = scmp.ne.s32.totalorder %s49, %s51
      %p55 = scmp.eq.s32.totalorder %s15, 0
      %p56 = por %p54, %p55
      %p57 = scmp.ne.s32.totalorder %s49, %s51
      %p58 = scmp.eq.s32.totalorder %s20, 1
      %p59 = por %p57, %p58
      %p60 = scmp.ne.s32.totalorder %s51, %s52
      %p61 = scmp.eq.s32.totalorder %s20, 0
      %p62 = por %p60, %p61
      %p63 = scmp.ne.s32.totalorder %s51, %s52
      %p64 = scmp.eq.s32.totalorder %s21, 1
      %p65 = por %p63, %p64
      %p67 = scmp.ne.s32.totalorder %s52, %s66
      %p68 = scmp.eq.s32.totalorder %s21, 0
      %p69 = por %p67, %p68
      %s71 = sadd.s32 %s70, 1
      %p74 = scmp.eq.s32.totalorder %s15, 1
      %p75 = scmp.ne.s32.totalorder %s70, %s72
      %p76 = scmp.eq.s32.totalorder %s15, 0
      %p77 = por %p75, %p76
      %p78 = scmp.ne.s32.totalorder %s70, %s72
      %p79 = scmp.eq.s32.totalorder %s20, 1
      %p80 = por %p78, %p79
      %p81 = scmp.ne.s32.totalorder %s72, %s73
      %p82 = scmp.eq.s32.totalorder %s20, 0
      %p83 = por %p81, %p82
      %p84 = scmp.ne.s32.totalorder %s72, %s73
      %p85 = scmp.eq.s32.totalorder %s21, 1
      %p86 = por %p84, %p85
      %p88 = scmp.ne.s32.totalorder %s73, %s87
      %p89 = scmp.eq.s32.totalorder %s21, 0
      %p90 = por %p88, %p89
      %s91 = ssub.s32 %s15, %s22
      %p92 = scmp.eq.s32.totalorder %s91, 0
      %s94 = sadd.s32 %s93, 1
      %s95 = scalar_select %p92, %s93, %s94
      %p98 = pneg %p92
      %p99 = scmp.eq.s32.totalorder %s15, 1
      %p100 = por %p98, %p99
      %p101 = scmp.ne.s32.totalorder %s93, %s96
      %p102 = scmp.eq.s32.totalorder %s15, 0
      %p103 = por %p101, %p102
      %p104 = scmp.ne.s32.totalorder %s93, %s96
      %p105 = scmp.eq.s32.totalorder %s20, 1
      %p106 = por %p104, %p105
      %p107 = scmp.ne.s32.totalorder %s96, %s97
      %p108 = scmp.eq.s32.totalorder %s20, 0
      %p109 = por %p107, %p108
      %p110 = scmp.ne.s32.totalorder %s96, %s97
      %p111 = scmp.eq.s32.totalorder %s21, 1
      %p112 = por %p110, %p111
      %p114 = scmp.ne.s32.totalorder %s97, %s113
      %p115 = scmp.eq.s32.totalorder %s21, 0
      %p116 = por %p114, %p115
      %s118 = sadd.s32 %s117, 1
      %p121 = scmp.eq.s32.totalorder %s15, 1
      %p122 = scmp.ne.s32.totalorder %s117, %s119
      %p123 = scmp.eq.s32.totalorder %s15, 0
      %p124 = por %p122, %p123
      %p125 = scmp.ne.s32.totalorder %s117, %s119
      %p126 = scmp.eq.s32.totalorder %s20, 1
      %p127 = por %p125, %p126
      %p128 = scmp.ne.s32.totalorder %s119, %s120
      %p129 = scmp.eq.s32.totalorder %s20, 0
      %p130 = por %p128, %p129
      %p131 = scmp.ne.s32.totalorder %s119, %s120
      %p132 = scmp.eq.s32.totalorder %s21, 1
      %p133 = por %p131, %p132
      %p135 = scmp.ne.s32.totalorder %s120, %s134
      %p136 = scmp.eq.s32.totalorder %s21, 0
      %p137 = por %p135, %p136
      %s139 = sadd.s32 %s138, 1
      %p142 = scmp.eq.s32.totalorder %s15, 1
      %p143 = scmp.ne.s32.totalorder %s138, %s140
      %p144 = scmp.eq.s32.totalorder %s15, 0
      %p145 = por %p143, %p144
      %p146 = scmp.ne.s32.totalorder %s138, %s140
      %p147 = scmp.eq.s32.totalorder %s20, 1
      %p148 = por %p146, %p147
      %p149 = scmp.ne.s32.totalorder %s140, %s141
      %p150 = scmp.eq.s32.totalorder %s20, 0
      %p151 = por %p149, %p150
      %p152 = scmp.ne.s32.totalorder %s140, %s141
      %p153 = scmp.eq.s32.totalorder %s21, 1
      %p154 = por %p152, %p153
      %p156 = scmp.ne.s32.totalorder %s141, %s155
      %p157 = scmp.eq.s32.totalorder %s21, 0
      %p158 = por %p156, %p157
      %s159 = ssub.s32 %s15, %s22
      %p160 = scmp.eq.s32.totalorder %s159, 0
      %s162 = sadd.s32 %s161, 1
      %s163 = scalar_select %p160, %s161, %s162
      %p166 = pneg %p160
      %p167 = scmp.eq.s32.totalorder %s15, 1
      %p168 = por %p166, %p167
      %p169 = scmp.ne.s32.totalorder %s161, %s164
      %p170 = scmp.eq.s32.totalorder %s15, 0
      %p171 = por %p169, %p170
      %p172 = scmp.ne.s32.totalorder %s161, %s164
      %p173 = scmp.eq.s32.totalorder %s20, 1
      %p174 = por %p172, %p173
      %p175 = scmp.ne.s32.totalorder %s164, %s165
      %p176 = scmp.eq.s32.totalorder %s20, 0
      %p177 = por %p175, %p176
      %p178 = scmp.ne.s32.totalorder %s164, %s165
      %p179 = scmp.eq.s32.totalorder %s21, 1
      %p180 = por %p178, %p179
      %p182 = scmp.ne.s32.totalorder %s165, %s181
      %p183 = scmp.eq.s32.totalorder %s21, 0
      %p184 = por %p182, %p183
      %p185 = scmp.le.s32.totalorder 1, %s15
      %p186 = scmp.lt.s32.totalorder %s15, 3
      %p187 = pnand %p185, %p186
      %p188 = pneg %p187
      // Predicated region
      $region9: #{tpu_custom_call.1} parent=5 // pred_check
        _
      $region10: #{tpu_custom_call.1} parent=5 // pred_check_branch
        %190 = sbr.rel (%p187) target = $region12
      $region11: #{tpu_custom_call.1} parent=5 // pred_region
        %s191 = ssub.s32 %s15, 1
        // Predicated region
        $region13: #{tpu_custom_call.1} parent=11 // pred_check
          %p192 = pneg %p62
        $region14: #{tpu_custom_call.1} parent=11 // pred_check_branch
          %194 = sbr.rel (%p192) target = $region16
        $region15: #{tpu_custom_call.1} parent=11 // pred_region
          _
        $region16: #{tpu_custom_call.1} parent=11 // pred_fallthru
          _
        // Predicated region
        $region17: #{tpu_custom_call.1} parent=11 // pred_check
          %p195 = pneg %p83
        $region18: #{tpu_custom_call.1} parent=11 // pred_check_branch
          %197 = sbr.rel (%p195) target = $region20
        $region19: #{tpu_custom_call.1} parent=11 // pred_region
          _
        $region20: #{tpu_custom_call.1} parent=11 // pred_fallthru
          _
        // Predicated region
        $region21: #{tpu_custom_call.1} parent=11 // pred_check
          %p198 = pneg %p130
        $region22: #{tpu_custom_call.1} parent=11 // pred_check_branch
          %200 = sbr.rel (%p198) target = $region24
        $region23: #{tpu_custom_call.1} parent=11 // pred_region
          _
        $region24: #{tpu_custom_call.1} parent=11 // pred_fallthru
          _
        // Predicated region
        $region25: #{tpu_custom_call.1} parent=11 // pred_check
          %p201 = pneg %p151
        $region26: #{tpu_custom_call.1} parent=11 // pred_check_branch
          %203 = sbr.rel (%p201) target = $region28
        $region27: #{tpu_custom_call.1} parent=11 // pred_region
          _
        $region28: #{tpu_custom_call.1} parent=11 // pred_fallthru
          _
      $region12: #{tpu_custom_call.1} parent=5 // pred_fallthru
        _
      %p204 = scmp.lt.s32.totalorder %s15, 2
      // Predicated region
      $region29: #{tpu_custom_call.1} parent=5 // pred_check
        %p205 = pneg %p204
      $region30: #{tpu_custom_call.1} parent=5 // pred_check_branch
        %207 = sbr.rel (%p205) target = $region32
      $region31: #{tpu_custom_call.1} parent=5 // pred_region
        // Predicated region
        $region33: #{tpu_custom_call.1} parent=31 // pred_check
          %p208 = pneg %p35
        $region34: #{tpu_custom_call.1} parent=31 // pred_check_branch
          %210 = sbr.rel (%p208) target = $region36
        $region35: #{tpu_custom_call.1} parent=31 // pred_region
          %p211 = scmp.lt.s32.totalorder %s15, 1
          %s212 = scalar_select %p211, %s15, 1
          %s213 = smul.addr %s212, 8
          %s214 = scalar_lea.vmem %s0, %s213
        $region36: #{tpu_custom_call.1} parent=31 // pred_fallthru
          _
        // Predicated region
        $region37: #{tpu_custom_call.1} parent=31 // pred_check
          %p215 = pneg %p103
        $region38: #{tpu_custom_call.1} parent=31 // pred_check_branch
          %217 = sbr.rel (%p215) target = $region40
        $region39: #{tpu_custom_call.1} parent=31 // pred_region
          %p218 = scmp.lt.s32.totalorder %s15, 1
          %s219 = scalar_select %p218, %s15, 1
          %s220 = smul.addr %s219, 8
          %s221 = scalar_lea.vmem %s3, %s220
        $region40: #{tpu_custom_call.1} parent=31 // pred_fallthru
          _
      $region32: #{tpu_custom_call.1} parent=5 // pred_fallthru
        _
      %p222 = scmp.le.s32.totalorder 1, %s15
      %p223 = scmp.lt.s32.totalorder %s15, 3
      %p224 = pnand %p222, %p223
      %p225 = pneg %p224
      // Predicated region
      $region41: #{tpu_custom_call.1} parent=5 // pred_check
        _
      $region42: #{tpu_custom_call.1} parent=5 // pred_check_branch
        %227 = sbr.rel (%p224) target = $region44
      $region43: #{tpu_custom_call.1} parent=5 // pred_region
        %s228 = ssub.s32 %s15, 1
        %p229 = scmp.lt.s32.totalorder %s20, 1
        %s230 = scalar_select %p229, %s20, 1
        %s231 = smul.addr %s230, 8
        %s232 = scalar_lea.vmem %s0, %s231
        %p233 = pneg %p41
        %p234 = pneg %p38
        %p235 = pneg %p62
        %p236 = pneg %p59
        %p237 = pneg %p83
        %p238 = pneg %p80
        %p239 = scmp.lt.s32.totalorder %s20, 1
        %s240 = scalar_select %p239, %s20, 1
        %s241 = smul.addr %s240, 8
        %s242 = scalar_lea.vmem %s3, %s241
        %p243 = pneg %p109
        %p244 = pneg %p106
        %p245 = pneg %p130
        %p246 = pneg %p127
        %p247 = pneg %p151
        %p248 = pneg %p148
        %p249 = pneg %p177
        %p250 = pneg %p174
        %s251 = sand.u32 %s164, 1
        %s252 = scalar_lea.sflag [#allocation3], %s251
        %s253 = sand.u32 %s164, 1
        %s254 = smul.addr %s253, 8
        %s255 = scalar_lea.vmem [#allocation2], %s254
        %p256 = scmp.lt.s32.totalorder %s20, 1
        %s257 = scalar_select %p256, %s20, 1
        %s258 = smul.addr %s257, 8
        %s259 = scalar_lea.vmem %s0, %s258
        %p260 = scmp.lt.s32.totalorder %s20, 1
        %s261 = scalar_select %p260, %s20, 1
        %s262 = smul.addr %s261, 8
        %s263 = scalar_lea.vmem %s3, %s262
        %v264 = vld [vmem:[%s259] sm:$0xff]
        %v265 = vld [vmem:[%s1] sm:$0xff]
        %v266 = vld [vmem:[%s1 + $0x8] sm:$0xff]
        %v267 = vld [vmem:[%s1 + $0x10] sm:$0xff]
        %v268 = vld [vmem:[%s1 + $0x18] sm:$0xff]
        %v269 = vld [vmem:[%s1 + $0x20] sm:$0xff]
        %v270 = vld [vmem:[%s1 + $0x28] sm:$0xff]
        %v271 = vld [vmem:[%s1 + $0x30] sm:$0xff]
        %v272 = vld [vmem:[%s1 + $0x38] sm:$0xff]
        %v273 = vld [vmem:[%s1 + $0x40] sm:$0xff]
        %v274 = vld [vmem:[%s1 + $0x48] sm:$0xff]
        %v275 = vld [vmem:[%s1 + $0x50] sm:$0xff]
        %v276 = vld [vmem:[%s1 + $0x58] sm:$0xff]
        %v277 = vld [vmem:[%s1 + $0x60] sm:$0xff]
        %v278 = vld [vmem:[%s1 + $0x68] sm:$0xff]
        %v279 = vld [vmem:[%s1 + $0x70] sm:$0xff]
        %v280 = vld [vmem:[%s1 + $0x78] sm:$0xff]
        %v281 = vld [vmem:[%s2] sm:$0x1]
        %v283 = vlaneseq
        %v284 = vshrl.u32 %v283, 7
        %v285 = vsub.s32 0, %v284
        %v286 = vrot.slane %v281, %v285
        %288 = vmatprep.subr.mxu0 0.0
        %289 = vmatpush1.msra.mxu0 %v265
        %290 = vmatprep.subr.mxu0 0.0
        %291 = vmatpush1.msra.mxu0 %v266
        %292 = vmatprep.subr.mxu0 0.0
        %293 = vmatpush1.msra.mxu0 %v267
        %294 = vmatprep.subr.mxu0 0.0
        %295 = vmatpush1.msra.mxu0 %v268
        %296 = vmatprep.subr.mxu0 0.0
        %297 = vmatpush1.msra.mxu0 %v269
        %298 = vmatprep.subr.mxu0 0.0
        %299 = vmatpush1.msra.mxu0 %v270
        %300 = vmatprep.subr.mxu0 0.0
        %301 = vmatpush1.msra.mxu0 %v271
        %302 = vmatprep.subr.mxu0 0.0
        %303 = vmatpush1.msra.mxu0 %v272
        %304 = vmatprep.subr.mxu0 0.0
        %305 = vmatpush1.msra.mxu0 %v273
        %306 = vmatprep.subr.mxu0 0.0
        %307 = vmatpush1.msra.mxu0 %v274
        %308 = vmatprep.subr.mxu0 0.0
        %309 = vmatpush1.msra.mxu0 %v275
        %310 = vmatprep.subr.mxu0 0.0
        %311 = vmatpush1.msra.mxu0 %v276
        %312 = vmatprep.subr.mxu0 0.0
        %313 = vmatpush1.msra.mxu0 %v277
        %314 = vmatprep.subr.mxu0 0.0
        %315 = vmatpush1.msra.mxu0 %v278
        %316 = vmatprep.subr.mxu0 0.0
        %317 = vmatpush1.msra.mxu0 %v279
        %318 = vmatprep.subr.mxu0 0.0
        %319 = vmatpush1.msra.mxu0 %v280
        %320 = vmatprep.subr.mxu0 0.0
        %321 = vmatpush1.msra.mxu0 0.0
        %322 = vmatprep.subr.mxu0 0.0
        %323 = vmatpush1.msra.mxu0 0.0
        %324 = vmatprep.subr.mxu0 0.0
        %325 = vmatpush1.msra.mxu0 0.0
        %326 = vmatprep.subr.mxu0 0.0
        %327 = vmatpush1.msra.mxu0 0.0
        %328 = vmatprep.subr.mxu0 0.0
        %329 = vmatpush1.msra.mxu0 0.0
        %330 = vmatprep.subr.mxu0 0.0
        %331 = vmatpush1.msra.mxu0 0.0
        %332 = vmatprep.subr.mxu0 0.0
        %333 = vmatpush1.msra.mxu0 0.0
        %334 = vmatprep.subr.mxu0 0.0
        %335 = vmatpush1.msra.mxu0 0.0
        %336 = vmatprep.subr.mxu0 0.0
        %337 = vmatpush1.msra.mxu0 0.0
        %338 = vmatprep.subr.mxu0 0.0
        %339 = vmatpush1.msra.mxu0 0.0
        %340 = vmatprep.subr.mxu0 0.0
        %341 = vmatpush1.msra.mxu0 0.0
        %342 = vmatprep.subr.mxu0 0.0
        %343 = vmatpush1.msra.mxu0 0.0
        %344 = vmatprep.subr.mxu0 0.0
        %345 = vmatpush1.msra.mxu0 0.0
        %346 = vmatprep.subr.mxu0 0.0
        %347 = vmatpush1.msra.mxu0 0.0
        %348 = vmatprep.subr.mxu0 0.0
        %349 = vmatpush1.msra.mxu0 0.0
        %350 = vmatprep.subr.mxu0 0.0
        %351 = vmatpush1.msra.mxu0 0.0
        %352 = vmatprep.mubr.f32.mxu0 0.0
        %353 = vmatmul.mubr.f32.gmra.mrb[0].mxu0 %v264
        %v354 = vpop.f32.mrb[0].mxu0
        %v355 = vadd.f32 %v286, %v354
        %v356 = vpop.f32.mrb[0].mxu0
        %357 = vdwg.mxu0
        %v358 = vld [vmem:[%s263] sm:$0xff]
        %v359 = vadd.f32 %v355, %v358
        %vm360 = vcmask 261120
        %v361 = vsel %vm360, %v359, 0.0
        %362 = vadd.xlane.f32.xlu0 %v361
        %v363 = vpop.xlane.xlu0 %362
        %v364 = vrcp.pop 32.0
        %v365 = vmul.f32 %v363, %v364
        %v366 = vsub.f32 %v359, %v365
        %v367 = vmul.f32 %v366, %v366
        %v368 = vsel %vm360, %v367, 0.0
        %369 = vadd.xlane.f32.xlu0 %v368
        %v370 = vpop.xlane.xlu0 %369
        %v371 = vmul.f32 %v370, %v364
        %v372 = vadd.f32 %v371, 1e-12
        %v373 = vrsqrt.pop %v372
        %v374 = vmul.f32 %v366, %v373
        %v375 = vld [vmem:[%s4] sm:$0x1]
        %v377 = vlaneseq
        %v378 = vshrl.u32 %v377, 7
        %v379 = vsub.s32 0, %v378
        %v380 = vrot.slane %v375, %v379
        %v382 = vmul.f32 %v374, %v380
        %v383 = vld [vmem:[%s5] sm:$0x1]
        %v385 = vlaneseq
        %v386 = vshrl.u32 %v385, 7
        %v387 = vsub.s32 0, %v386
        %v388 = vrot.slane %v383, %v387
        %v390 = vadd.f32 %v382, %v388
        %391 = vst.msk [vmem:[%s255] sm:$0xff] %vm360, %v390
        %s392 = sand.u32 %s164, 1
        %s393 = scalar_lea.sflag [#allocation3], %s392
        %s394 = sand.u32 %s164, 1
        %s395 = smul.addr %s394, 8
        %s396 = scalar_lea.vmem [#allocation2], %s395
        // Predicated region
        $region45: #{tpu_custom_call.1} parent=43 // pred_check
          %p397 = pneg %p174
        $region46: #{tpu_custom_call.1} parent=43 // pred_check_branch
          %399 = sbr.rel (%p397) target = $region48
        $region47: #{tpu_custom_call.1} parent=43 // pred_region
          %s401 = ssub.s32 128, 128
          %402 = vsyncadd %s393, %s401
          %s403 = smul.addr %s20, 128
          %s404 = scalar_lea.hbm %s6, %s403
          %s406 = sshll.u32 %s396, 4
          %s407 = int_to_ptr.vmem [resolvable:$true] %s406
          %409 = dma.vmem_to_hbm [thread:$0]  %s407, 128, %s404, %s393
        $region48: #{tpu_custom_call.1} parent=43 // pred_fallthru
          _
      $region44: #{tpu_custom_call.1} parent=5 // pred_fallthru
        _
      %p410 = scmp.le.s32.totalorder 2, %s15
      // Predicated region
      $region49: #{tpu_custom_call.1} parent=5 // pred_check
        %p411 = pneg %p410
      $region50: #{tpu_custom_call.1} parent=5 // pred_check_branch
        %413 = sbr.rel (%p411) target = $region52
      $region51: #{tpu_custom_call.1} parent=5 // pred_region
        %s414 = ssub.s32 %s15, 2
        // Predicated region
        $region53: #{tpu_custom_call.1} parent=51 // pred_check
          %p415 = pneg %p180
        $region54: #{tpu_custom_call.1} parent=51 // pred_check_branch
          %417 = sbr.rel (%p415) target = $region56
        $region55: #{tpu_custom_call.1} parent=51 // pred_region
          %s418 = sand.u32 %s165, 1
          %s419 = scalar_lea.sflag [#allocation3], %s418
          %s420 = sand.u32 %s165, 1
          %s421 = smul.addr %s420, 8
          %s422 = scalar_lea.vmem [#allocation2], %s421
          %423 = dma.done %s419, 128
        $region56: #{tpu_custom_call.1} parent=51 // pred_fallthru
          _
      $region52: #{tpu_custom_call.1} parent=5 // pred_fallthru
        _
    $region6: #{tpu_custom_call.1} parent=1 // loop_footer
      %s19 = sadd.s32 1, %s15
    $region7: #{tpu_custom_call.1} parent=1 // loop_footer_branch
      %14 = sbr.rel target = $region3
    $region8: #{tpu_custom_call.1} parent=1 // loop_exit
      _
    %424 = vsyncpa [#allocation3], 1
    %s425 = scalar_lea.sflag [#allocation3], 1
    %426 = vsyncpa %s425, 1

// kernel: tpu_custom_call.1
$region0: #{tpu_custom_call.1}
  #allocation0 [shape = 'u32[]', space=smem, size = 0x4, offset = 0x4, fixed_abs, tag = 'smem constant byte address 0x4 - core index']
  #allocation1 [shape = 'u32[144,128]{1,0:T(1,128)}', space=vmem, size = 0x12000, scoped, tag = 'internal scratch']
  %s0 = inlined_call_operand.vmem [shape: f32[16,128], index: 0, kind: input, shape index: {}]
  %s1 = inlined_call_operand.vmem [shape: f32[128,32], index: 1, kind: input, shape index: {}]
  %s2 = inlined_call_operand.vmem [shape: f32[1,32], index: 2, kind: input, shape index: {}]
  %s3 = inlined_call_operand.vmem [shape: f32[16,32], index: 3, kind: input, shape index: {}]
  %s4 = inlined_call_operand.vmem [shape: f32[1,32], index: 4, kind: input, shape index: {}]
  %s5 = inlined_call_operand.vmem [shape: f32[1,32], index: 5, kind: input, shape index: {}]
  %s6 = inlined_call_operand.hbm [shape: f32[16,32], index: 6, kind: output, shape index: {}]
  %s7 = sld [smem:[#allocation0]]
  $region57: #{tpu_custom_call.1} parent=0
    _
  %s9 = ssub.s32 1, %s7
  %s10 = scalar_select 0, %s9, %s7
  $region1: #{tpu_custom_call.1} parent=0
    #allocation2 [shape = 'u8[8192]{0}', space=vmem, size = 0x2000, scoped, tag = 'output window, operand 0']
    #allocation3 [shape = 's32[2]{0}', space=sflag, size = 0x8, scoped, tag = 'scoped memory for tpu_custom_call.1']
    %11 = vsyncpa [#allocation3], 0
    %s12 = scalar_lea.sflag [#allocation3], 1
    %13 = vsyncpa %s12, 0
    loop: start=0, step=1, limit=4
    $region2: #{tpu_custom_call.1} parent=1 // loop_pre_header
      _
    $region3: #{tpu_custom_call.1} parent=1 // loop_header
      %s15 = sphi 0, %s19
      %p16 = scmp.ge.s32.totalorder %s15, 4
      %s25 = sphi 0, %s27
      %s28 = sphi 0, %s25
      %s29 = sphi 0, %s28
      %s45 = sphi 0, %s29
      %s49 = sphi 0, %s49
      %s51 = sphi 0, %s49
      %s52 = sphi 0, %s51
      %s66 = sphi 0, %s52
      %s70 = sphi 0, %s70
      %s72 = sphi 0, %s70
      %s73 = sphi 0, %s72
      %s87 = sphi 0, %s73
      %s93 = sphi 0, %s95
      %s96 = sphi 0, %s93
      %s97 = sphi 0, %s96
      %s113 = sphi 0, %s97
      %s117 = sphi 0, %s117
      %s119 = sphi 0, %s117
      %s120 = sphi 0, %s119
      %s134 = sphi 0, %s120
      %s138 = sphi 0, %s138
      %s140 = sphi 0, %s138
      %s141 = sphi 0, %s140
      %s155 = sphi 0, %s141
      %s161 = sphi 0, %s163
      %s164 = sphi 0, %s161
      %s165 = sphi 0, %s164
      %s181 = sphi 0, %s165
    $region4: #{tpu_custom_call.1} parent=1 // loop_header_branch
      %18 = sbr.rel (%p16) target = $region8
    $region5: #{tpu_custom_call.1} parent=1 // loop_body
      %s20 = ssub.s32 %s15, 1
      %s21 = ssub.s32 %s15, 2
      %s22 = sadd.s32 %s15, 1
      %s23 = ssub.s32 %s15, %s22
      %p24 = scmp.eq.s32.totalorder %s23, 0
      %s26 = sadd.s32 %s25, 1
      %s27 = scalar_select %p24, %s25, %s26
      %p30 = pneg %p24
      %p31 = scmp.eq.s32.totalorder %s15, 1
      %p32 = por %p30, %p31
      %p33 = scmp.ne.s32.totalorder %s25, %s28
      %p34 = scmp.eq.s32.totalorder %s15, 0
      %p35 = por %p33, %p34
      %p36 = scmp.ne.s32.totalorder %s25, %s28
      %p37 = scmp.eq.s32.totalorder %s20, 1
      %p38 = por %p36, %p37
      %p39 = scmp.ne.s32.totalorder %s28, %s29
      %p40 = scmp.eq.s32.totalorder %s20, 0
      %p41 = por %p39, %p40
      %p42 = scmp.ne.s32.totalorder %s28, %s29
      %p43 = scmp.eq.s32.totalorder %s21, 1
      %p44 = por %p42, %p43
      %p46 = scmp.ne.s32.totalorder %s29, %s45
      %p47 = scmp.eq.s32.totalorder %s21, 0
      %p48 = por %p46, %p47
      %s50 = sadd.s32 %s49, 1
      %p53 = scmp.eq.s32.totalorder %s15, 1
      %p54 = scmp.ne.s32.totalorder %s49, %s51
      %p55 = scmp.eq.s32.totalorder %s15, 0
      %p56 = por %p54, %p55
      %p57 = scmp.ne.s32.totalorder %s49, %s51
      %p58 = scmp.eq.s32.totalorder %s20, 1
      %p59 = por %p57, %p58
      %p60 = scmp.ne.s32.totalorder %s51, %s52
      %p61 = scmp.eq.s32.totalorder %s20, 0
      %p62 = por %p60, %p61
      %p63 = scmp.ne.s32.totalorder %s51, %s52
      %p64 = scmp.eq.s32.totalorder %s21, 1
      %p65 = por %p63, %p64
      %p67 = scmp.ne.s32.totalorder %s52, %s66
      %p68 = scmp.eq.s32.totalorder %s21, 0
      %p69 = por %p67, %p68
      %s71 = sadd.s32 %s70, 1
      %p74 = scmp.eq.s32.totalorder %s15, 1
      %p75 = scmp.ne.s32.totalorder %s70, %s72
      %p76 = scmp.eq.s32.totalorder %s15, 0
      %p77 = por %p75, %p76
      %p78 = scmp.ne.s32.totalorder %s70, %s72
      %p79 = scmp.eq.s32.totalorder %s20, 1
      %p80 = por %p78, %p79
      %p81 = scmp.ne.s32.totalorder %s72, %s73
      %p82 = scmp.eq.s32.totalorder %s20, 0
      %p83 = por %p81, %p82
      %p84 = scmp.ne.s32.totalorder %s72, %s73
      %p85 = scmp.eq.s32.totalorder %s21, 1
      %p86 = por %p84, %p85
      %p88 = scmp.ne.s32.totalorder %s73, %s87
      %p89 = scmp.eq.s32.totalorder %s21, 0
      %p90 = por %p88, %p89
      %s91 = ssub.s32 %s15, %s22
      %p92 = scmp.eq.s32.totalorder %s91, 0
      %s94 = sadd.s32 %s93, 1
      %s95 = scalar_select %p92, %s93, %s94
      %p98 = pneg %p92
      %p99 = scmp.eq.s32.totalorder %s15, 1
      %p100 = por %p98, %p99
      %p101 = scmp.ne.s32.totalorder %s93, %s96
      %p102 = scmp.eq.s32.totalorder %s15, 0
      %p103 = por %p101, %p102
      %p104 = scmp.ne.s32.totalorder %s93, %s96
      %p105 = scmp.eq.s32.totalorder %s20, 1
      %p106 = por %p104, %p105
      %p107 = scmp.ne.s32.totalorder %s96, %s97
      %p108 = scmp.eq.s32.totalorder %s20, 0
      %p109 = por %p107, %p108
      %p110 = scmp.ne.s32.totalorder %s96, %s97
      %p111 = scmp.eq.s32.totalorder %s21, 1
      %p112 = por %p110, %p111
      %p114 = scmp.ne.s32.totalorder %s97, %s113
      %p115 = scmp.eq.s32.totalorder %s21, 0
      %p116 = por %p114, %p115
      %s118 = sadd.s32 %s117, 1
      %p121 = scmp.eq.s32.totalorder %s15, 1
      %p122 = scmp.ne.s32.totalorder %s117, %s119
      %p123 = scmp.eq.s32.totalorder %s15, 0
      %p124 = por %p122, %p123
      %p125 = scmp.ne.s32.totalorder %s117, %s119
      %p126 = scmp.eq.s32.totalorder %s20, 1
      %p127 = por %p125, %p126
      %p128 = scmp.ne.s32.totalorder %s119, %s120
      %p129 = scmp.eq.s32.totalorder %s20, 0
      %p130 = por %p128, %p129
      %p131 = scmp.ne.s32.totalorder %s119, %s120
      %p132 = scmp.eq.s32.totalorder %s21, 1
      %p133 = por %p131, %p132
      %p135 = scmp.ne.s32.totalorder %s120, %s134
      %p136 = scmp.eq.s32.totalorder %s21, 0
      %p137 = por %p135, %p136
      %s139 = sadd.s32 %s138, 1
      %p142 = scmp.eq.s32.totalorder %s15, 1
      %p143 = scmp.ne.s32.totalorder %s138, %s140
      %p144 = scmp.eq.s32.totalorder %s15, 0
      %p145 = por %p143, %p144
      %p146 = scmp.ne.s32.totalorder %s138, %s140
      %p147 = scmp.eq.s32.totalorder %s20, 1
      %p148 = por %p146, %p147
      %p149 = scmp.ne.s32.totalorder %s140, %s141
      %p150 = scmp.eq.s32.totalorder %s20, 0
      %p151 = por %p149, %p150
      %p152 = scmp.ne.s32.totalorder %s140, %s141
      %p153 = scmp.eq.s32.totalorder %s21, 1
      %p154 = por %p152, %p153
      %p156 = scmp.ne.s32.totalorder %s141, %s155
      %p157 = scmp.eq.s32.totalorder %s21, 0
      %p158 = por %p156, %p157
      %s159 = ssub.s32 %s15, %s22
      %p160 = scmp.eq.s32.totalorder %s159, 0
      %s162 = sadd.s32 %s161, 1
      %s163 = scalar_select %p160, %s161, %s162
      %p166 = pneg %p160
      %p167 = scmp.eq.s32.totalorder %s15, 1
      %p168 = por %p166, %p167
      %p169 = scmp.ne.s32.totalorder %s161, %s164
      %p170 = scmp.eq.s32.totalorder %s15, 0
      %p171 = por %p169, %p170
      %p172 = scmp.ne.s32.totalorder %s161, %s164
      %p173 = scmp.eq.s32.totalorder %s20, 1
      %p174 = por %p172, %p173
      %p175 = scmp.ne.s32.totalorder %s164, %s165
      %p176 = scmp.eq.s32.totalorder %s20, 0
      %p177 = por %p175, %p176
      %p178 = scmp.ne.s32.totalorder %s164, %s165
      %p179 = scmp.eq.s32.totalorder %s21, 1
      %p180 = por %p178, %p179
      %p182 = scmp.ne.s32.totalorder %s165, %s181
      %p183 = scmp.eq.s32.totalorder %s21, 0
      %p184 = por %p182, %p183
      %p185 = scmp.le.s32.totalorder 1, %s15
      %p186 = scmp.lt.s32.totalorder %s15, 3
      %p187 = pnand %p185, %p186
      %p188 = pneg %p187
      // Predicated region
      $region9: #{tpu_custom_call.1} parent=5 // pred_check
        _
      $region10: #{tpu_custom_call.1} parent=5 // pred_check_branch
        %190 = sbr.rel (%p187) target = $region12
      $region11: #{tpu_custom_call.1} parent=5 // pred_region
        %s191 = ssub.s32 %s15, 1
        // Predicated region
        $region13: #{tpu_custom_call.1} parent=11 // pred_check
          %p192 = pneg %p62
        $region14: #{tpu_custom_call.1} parent=11 // pred_check_branch
          %194 = sbr.rel (%p192) target = $region16
        $region15: #{tpu_custom_call.1} parent=11 // pred_region
          _
        $region16: #{tpu_custom_call.1} parent=11 // pred_fallthru
          _
        // Predicated region
        $region17: #{tpu_custom_call.1} parent=11 // pred_check
          %p195 = pneg %p83
        $region18: #{tpu_custom_call.1} parent=11 // pred_check_branch
          %197 = sbr.rel (%p195) target = $region20
        $region19: #{tpu_custom_call.1} parent=11 // pred_region
          _
        $region20: #{tpu_custom_call.1} parent=11 // pred_fallthru
          _
        // Predicated region
        $region21: #{tpu_custom_call.1} parent=11 // pred_check
          %p198 = pneg %p130
        $region22: #{tpu_custom_call.1} parent=11 // pred_check_branch
          %200 = sbr.rel (%p198) target = $region24
        $region23: #{tpu_custom_call.1} parent=11 // pred_region
          _
        $region24: #{tpu_custom_call.1} parent=11 // pred_fallthru
          _
        // Predicated region
        $region25: #{tpu_custom_call.1} parent=11 // pred_check
          %p201 = pneg %p151
        $region26: #{tpu_custom_call.1} parent=11 // pred_check_branch
          %203 = sbr.rel (%p201) target = $region28
        $region27: #{tpu_custom_call.1} parent=11 // pred_region
          _
        $region28: #{tpu_custom_call.1} parent=11 // pred_fallthru
          _
      $region12: #{tpu_custom_call.1} parent=5 // pred_fallthru
        _
      %p204 = scmp.lt.s32.totalorder %s15, 2
      // Predicated region
      $region29: #{tpu_custom_call.1} parent=5 // pred_check
        %p205 = pneg %p204
      $region30: #{tpu_custom_call.1} parent=5 // pred_check_branch
        %207 = sbr.rel (%p205) target = $region32
      $region31: #{tpu_custom_call.1} parent=5 // pred_region
        // Predicated region
        $region33: #{tpu_custom_call.1} parent=31 // pred_check
          %p208 = pneg %p35
        $region34: #{tpu_custom_call.1} parent=31 // pred_check_branch
          %210 = sbr.rel (%p208) target = $region36
        $region35: #{tpu_custom_call.1} parent=31 // pred_region
          %p211 = scmp.lt.s32.totalorder %s15, 1
          %s212 = scalar_select %p211, %s15, 1
          %s213 = smul.addr %s212, 8
          %s214 = scalar_lea.vmem %s0, %s213
        $region36: #{tpu_custom_call.1} parent=31 // pred_fallthru
          _
        // Predicated region
        $region37: #{tpu_custom_call.1} parent=31 // pred_check
          %p215 = pneg %p103
        $region38: #{tpu_custom_call.1} parent=31 // pred_check_branch
          %217 = sbr.rel (%p215) target = $region40
        $region39: #{tpu_custom_call.1} parent=31 // pred_region
          %p218 = scmp.lt.s32.totalorder %s15, 1
          %s219 = scalar_select %p218, %s15, 1
          %s220 = smul.addr %s219, 8
          %s221 = scalar_lea.vmem %s3, %s220
        $region40: #{tpu_custom_call.1} parent=31 // pred_fallthru
          _
      $region32: #{tpu_custom_call.1} parent=5 // pred_fallthru
        _
      %p222 = scmp.le.s32.totalorder 1, %s15
      %p223 = scmp.lt.s32.totalorder %s15, 3
      %p224 = pnand %p222, %p223
      %p225 = pneg %p224
      // Predicated region
      $region41: #{tpu_custom_call.1} parent=5 // pred_check
        _
      $region42: #{tpu_custom_call.1} parent=5 // pred_check_branch
        %227 = sbr.rel (%p224) target = $region44
      $region43: #{tpu_custom_call.1} parent=5 // pred_region
        %s228 = ssub.s32 %s15, 1
        %p229 = scmp.lt.s32.totalorder %s20, 1
        %s230 = scalar_select %p229, %s20, 1
        %s231 = smul.addr %s230, 8
        %s232 = scalar_lea.vmem %s0, %s231
        %p233 = pneg %p41
        %p234 = pneg %p38
        %p235 = pneg %p62
        %p236 = pneg %p59
        %p237 = pneg %p83
        %p238 = pneg %p80
        %p239 = scmp.lt.s32.totalorder %s20, 1
        %s240 = scalar_select %p239, %s20, 1
        %s241 = smul.addr %s240, 8
        %s242 = scalar_lea.vmem %s3, %s241
        %p243 = pneg %p109
        %p244 = pneg %p106
        %p245 = pneg %p130
        %p246 = pneg %p127
        %p247 = pneg %p151
        %p248 = pneg %p148
        %p249 = pneg %p177
        %p250 = pneg %p174
        %s251 = sand.u32 %s164, 1
        %s252 = scalar_lea.sflag [#allocation3], %s251
        %s253 = sand.u32 %s164, 1
        %s254 = smul.addr %s253, 8
        %s255 = scalar_lea.vmem [#allocation2], %s254
        %p256 = scmp.lt.s32.totalorder %s20, 1
        %s257 = scalar_select %p256, %s20, 1
        %s258 = smul.addr %s257, 8
        %s259 = scalar_lea.vmem %s0, %s258
        %p260 = scmp.lt.s32.totalorder %s20, 1
        %s261 = scalar_select %p260, %s20, 1
        %s262 = smul.addr %s261, 8
        %s263 = scalar_lea.vmem %s3, %s262
        %v264 = vld [vmem:[%s259] sm:$0xff]
        %v265 = vld [vmem:[%s1] sm:$0xff]
        %v266 = vld [vmem:[%s1 + $0x8] sm:$0xff]
        %v267 = vld [vmem:[%s1 + $0x10] sm:$0xff]
        %v268 = vld [vmem:[%s1 + $0x18] sm:$0xff]
        %v269 = vld [vmem:[%s1 + $0x20] sm:$0xff]
        %v270 = vld [vmem:[%s1 + $0x28] sm:$0xff]
        %v271 = vld [vmem:[%s1 + $0x30] sm:$0xff]
        %v272 = vld [vmem:[%s1 + $0x38] sm:$0xff]
        %v273 = vld [vmem:[%s1 + $0x40] sm:$0xff]
        %v274 = vld [vmem:[%s1 + $0x48] sm:$0xff]
        %v275 = vld [vmem:[%s1 + $0x50] sm:$0xff]
        %v276 = vld [vmem:[%s1 + $0x58] sm:$0xff]
        %v277 = vld [vmem:[%s1 + $0x60] sm:$0xff]
        %v278 = vld [vmem:[%s1 + $0x68] sm:$0xff]
        %v279 = vld [vmem:[%s1 + $0x70] sm:$0xff]
        %v280 = vld [vmem:[%s1 + $0x78] sm:$0xff]
        %v281 = vld [vmem:[%s2] sm:$0x1]
        %v283 = vlaneseq
        %v284 = vshrl.u32 %v283, 7
        %v285 = vsub.s32 0, %v284
        %v286 = vrot.slane %v281, %v285
        %288 = vmatprep.subr.mxu0 0.0
        %289 = vmatpush1.msra.mxu0 %v265
        %290 = vmatprep.subr.mxu0 0.0
        %291 = vmatpush1.msra.mxu0 %v266
        %292 = vmatprep.subr.mxu0 0.0
        %293 = vmatpush1.msra.mxu0 %v267
        %294 = vmatprep.subr.mxu0 0.0
        %295 = vmatpush1.msra.mxu0 %v268
        %296 = vmatprep.subr.mxu0 0.0
        %297 = vmatpush1.msra.mxu0 %v269
        %298 = vmatprep.subr.mxu0 0.0
        %299 = vmatpush1.msra.mxu0 %v270
        %300 = vmatprep.subr.mxu0 0.0
        %301 = vmatpush1.msra.mxu0 %v271
        %302 = vmatprep.subr.mxu0 0.0
        %303 = vmatpush1.msra.mxu0 %v272
        %304 = vmatprep.subr.mxu0 0.0
        %305 = vmatpush1.msra.mxu0 %v273
        %306 = vmatprep.subr.mxu0 0.0
        %307 = vmatpush1.msra.mxu0 %v274
        %308 = vmatprep.subr.mxu0 0.0
        %309 = vmatpush1.msra.mxu0 %v275
        %310 = vmatprep.subr.mxu0 0.0
        %311 = vmatpush1.msra.mxu0 %v276
        %312 = vmatprep.subr.mxu0 0.0
        %313 = vmatpush1.msra.mxu0 %v277
        %314 = vmatprep.subr.mxu0 0.0
        %315 = vmatpush1.msra.mxu0 %v278
        %316 = vmatprep.subr.mxu0 0.0
        %317 = vmatpush1.msra.mxu0 %v279
        %318 = vmatprep.subr.mxu0 0.0
        %319 = vmatpush1.msra.mxu0 %v280
        %320 = vmatprep.subr.mxu0 0.0
        %321 = vmatpush1.msra.mxu0 0.0
        %322 = vmatprep.subr.mxu0 0.0
        %323 = vmatpush1.msra.mxu0 0.0
        %324 = vmatprep.subr.mxu0 0.0
        %325 = vmatpush1.msra.mxu0 0.0
        %326 = vmatprep.subr.mxu0 0.0
        %327 = vmatpush1.msra.mxu0 0.0
        %328 = vmatprep.subr.mxu0 0.0
        %329 = vmatpush1.msra.mxu0 0.0
        %330 = vmatprep.subr.mxu0 0.0
        %331 = vmatpush1.msra.mxu0 0.0
        %332 = vmatprep.subr.mxu0 0.0
        %333 = vmatpush1.msra.mxu0 0.0
        %334 = vmatprep.subr.mxu0 0.0
        %335 = vmatpush1.msra.mxu0 0.0
        %336 = vmatprep.subr.mxu0 0.0
        %337 = vmatpush1.msra.mxu0 0.0
        %338 = vmatprep.subr.mxu0 0.0
        %339 = vmatpush1.msra.mxu0 0.0
        %340 = vmatprep.subr.mxu0 0.0
        %341 = vmatpush1.msra.mxu0 0.0
        %342 = vmatprep.subr.mxu0 0.0
        %343 = vmatpush1.msra.mxu0 0.0
        %344 = vmatprep.subr.mxu0 0.0
        %345 = vmatpush1.msra.mxu0 0.0
        %346 = vmatprep.subr.mxu0 0.0
        %347 = vmatpush1.msra.mxu0 0.0
        %348 = vmatprep.subr.mxu0 0.0
        %349 = vmatpush1.msra.mxu0 0.0
        %350 = vmatprep.subr.mxu0 0.0
        %351 = vmatpush1.msra.mxu0 0.0
        %352 = vmatprep.mubr.f32.mxu0 0.0
        %353 = vmatmul.mubr.f32.gmra.mrb[0].mxu0 %v264
        %v354 = vpop.f32.mrb[0].mxu0
        %v355 = vadd.f32 %v286, %v354
        %v356 = vpop.f32.mrb[0].mxu0
        %357 = vdwg.mxu0
        %v358 = vld [vmem:[%s263] sm:$0xff]
        %v359 = vadd.f32 %v355, %v358
        %vm360 = vcmask 261120
        %v361 = vsel %vm360, %v359, 0.0
        %362 = vadd.xlane.f32.xlu0 %v361
        %v363 = vpop.xlane.xlu0 %362
        %v364 = vrcp.pop 32.0
        %v365 = vmul.f32 %v363, %v364
        %v366 = vsub.f32 %v359, %v365
        %v367 = vmul.f32 %v366, %v366
        %v368 = vsel %vm360, %v367, 0.0
        %369 = vadd.xlane.f32.xlu0 %v368
        %v370 = vpop.xlane.xlu0 %369
        %v371 = vmul.f32 %v370, %v364
        %v372 = vadd.f32 %v371, 1e-12
        %v373 = vrsqrt.pop %v372
        %v374 = vmul.f32 %v366, %v373
        %v375 = vld [vmem:[%s4] sm:$0x1]
        %v377 = vlaneseq
        %v378 = vshrl.u32 %v377, 7
        %v379 = vsub.s32 0, %v378
        %v380 = vrot.slane %v375, %v379
        %v382 = vmul.f32 %v374, %v380
        %v383 = vld [vmem:[%s5] sm:$0x1]
        %v385 = vlaneseq
        %v386 = vshrl.u32 %v385, 7
        %v387 = vsub.s32 0, %v386
        %v388 = vrot.slane %v383, %v387
        %v390 = vadd.f32 %v382, %v388
        %391 = vst.msk [vmem:[%s255] sm:$0xff] %vm360, %v390
        %s392 = sand.u32 %s164, 1
        %s393 = scalar_lea.sflag [#allocation3], %s392
        %s394 = sand.u32 %s164, 1
        %s395 = smul.addr %s394, 8
        %s396 = scalar_lea.vmem [#allocation2], %s395
        // Predicated region
        $region45: #{tpu_custom_call.1} parent=43 // pred_check
          %p397 = pneg %p174
        $region46: #{tpu_custom_call.1} parent=43 // pred_check_branch
          %399 = sbr.rel (%p397) target = $region48
        $region47: #{tpu_custom_call.1} parent=43 // pred_region
          %s401 = ssub.s32 128, 128
          %402 = vsyncadd %s393, %s401
          %s403 = smul.addr %s20, 128
          %s404 = scalar_lea.hbm %s6, %s403
          %s406 = sshll.u32 %s396, 4
          %s407 = int_to_ptr.vmem [resolvable:$true] %s406
          %409 = dma.vmem_to_hbm [thread:$0]  %s407, 128, %s404, %s393
        $region48: #{tpu_custom_call.1} parent=43 // pred_fallthru
          _
      $region44: #{tpu_custom_call.1} parent=5 // pred_fallthru
        _
      %p410 = scmp.le.s32.totalorder 2, %s15
      // Predicated region
      $region49: #{tpu_custom_call.1} parent=5 // pred_check
        %p411 = pneg %p410
      $region50: #{tpu_custom_call.1} parent=5 // pred_check_branch
        %413 = sbr.rel (%p411) target = $region52
      $region51: #{tpu_custom_call.1} parent=5 // pred_region
        %s414 = ssub.s32 %s15, 2
        // Predicated region
        $region53: #{tpu_custom_call.1} parent=51 // pred_check
          %p415 = pneg %p180
        $region54: #{tpu_custom_call.1} parent=51 // pred_check_branch
          %417 = sbr.rel (%p415) target = $region56
        $region55: #{tpu_custom_call.1} parent=51 // pred_region
          %s418 = sand.u32 %s165, 1
          %s419 = scalar_lea.sflag [#allocation3], %s418
          %s420 = sand.u32 %s165, 1
          %s421 = smul.addr %s420, 8
          %s422 = scalar_lea.vmem [#allocation2], %s421
          %423 = dma.done %s419, 128
        $region56: #{tpu_custom_call.1} parent=51 // pred_fallthru
          _
      $region52: #{tpu_custom_call.1} parent=5 // pred_fallthru
        _
    $region6: #{tpu_custom_call.1} parent=1 // loop_footer
      %s19 = sadd.s32 1, %s15
    $region7: #{tpu_custom_call.1} parent=1 // loop_footer_branch
      %14 = sbr.rel target = $region3
    $region8: #{tpu_custom_call.1} parent=1 // loop_exit
      _
    %424 = vsyncpa [#allocation3], 1
    %s425 = scalar_lea.sflag [#allocation3], 1
    %426 = vsyncpa %s425, 1

</llo_original>
